<compile_context>
chip_gen: v6e
topology: v6e:2x2x1
jax: 0.10.0
libtpu: 0.0.40
codegen_flags: <defaults>
</compile_context>

<pallas_src>
import jax
import jax.numpy as jnp
from jax.experimental import pallas as pl
from jax.experimental.pallas import tpu as pltpu


def _num_chunks(shift_space: bool, shift_time: bool) -> int:
    if shift_space and shift_time:
        return 5
    if shift_space:
        return 4
    return 3


def _make_shift_kernel(image_size, shift_space, shift_time, dc, d_shift, carry_rows,
                       write_passthrough):
    """Per-(batch, token-block) kernel.  Block view is (img_seq rows, d_blk lanes)."""
    S = image_size * image_size  # tokens per frame == rows per block

    def kernel(x_ref, o_ref, carry_ref):
        r = pl.program_id(1)
        # Global row of x for each row of this block; video-token index t = row - 1
        # (row 0 of the whole sequence is the BOS token).
        rows = jax.lax.broadcasted_iota(jnp.int32, (S, 1), 0)
        t = r * S + rows - 1

        idx = 0
        if shift_time:
            lo, hi = idx * dc, (idx + 1) * dc
            # Shift by one frame == exactly one token block: source is the previous block.
            src = carry_ref[:, lo:hi]
            mask = t >= S                                   # frame index > 0
            o_ref[:, lo:hi] = jnp.where(mask, src, jnp.zeros_like(src))
            idx += 1
        if shift_space:
            # Shift by one image row (image_size tokens).
            lo, hi = idx * dc, (idx + 1) * dc
            src = jnp.concatenate(
                [carry_ref[carry_rows - image_size:, lo:hi],
                 x_ref[:S - image_size, lo:hi]], axis=0)
            mask = jnp.logical_and(t >= 0, (t % S) >= image_size)   # image-row > 0
            o_ref[:, lo:hi] = jnp.where(mask, src, jnp.zeros_like(src))
            idx += 1
            # Shift by one token (image column).
            lo, hi = idx * dc, (idx + 1) * dc
            src = jnp.concatenate(
                [carry_ref[carry_rows - 1:, lo:hi],
                 x_ref[:S - 1, lo:hi]], axis=0)
            mask = jnp.logical_and(t >= 0, (t % image_size) >= 1)   # image-col > 0
            o_ref[:, lo:hi] = jnp.where(mask, src, jnp.zeros_like(src))
            idx += 1

        if write_passthrough:
            # Remaining channel chunks pass through unchanged (out-of-place path only;
            # the aliased path never touches them at all).
            o_ref[:, d_shift:] = x_ref[:, d_shift:]

        # BOS token (global row 0) passes through unchanged; it only lives in block 0.
        @pl.when(r == 0)
        def _():
            o_ref[0:1, :] = x_ref[0:1, :]

        # Stash this block's ORIGINAL shifted channels for the next block's shifts.
        carry_ref[...] = x_ref[S - carry_rows:, :d_shift]

    return kernel


def shift_video_tokens(x, image_size, shift_space=True, shift_time=False, fn=None,
                       in_place=True):
    """JAX/Pallas equivalent of ShiftVideoTokens.forward.

    in_place=True uses input_output_aliases so untouched (pass-through) channels and the
    BOS row are never read or written; the input buffer may be donated -- do not reuse
    `x` after the call.  Falls back to the out-of-place path when the shifted channel
    width is not 128-lane aligned.
    """
    if fn is None:
        fn = lambda y: y  # identity stand-in for the wrapped sub-module

    if not shift_space and not shift_time:
        return fn(x)

    B, N, D = x.shape
    S = image_size * image_size
    nc = _num_chunks(shift_space, shift_time)
    # TODO(synk): torch.chunk allows D not divisible by the chunk count (uneven chunks);
    #             only the divisible case is implemented here.
    assert D % nc == 0, "hidden dim must be divisible by the number of shift chunks"
    dc = D // nc
    n_shift = (1 if shift_time else 0) + (2 if shift_space else 0)
    d_shift = n_shift * dc                       # shifted chunks are the leading lanes
    carry_rows = S if shift_time else image_size  # rows of history the shifts can reach
    num_blocks = pl.cdiv(N, S)                   # ragged tail handled by Pallas OOB rules

    # Aliased fast path only when the touched lane range stays lane-dense (128-aligned).
    use_alias = bool(in_place) and (d_shift % 128 == 0)
    d_blk = d_shift if use_alias else D

    kernel = _make_shift_kernel(image_size, shift_space, shift_time, dc, d_shift,
                                carry_rows, write_passthrough=not use_alias)

    blk = (pl.Squeezed(), S, d_blk)
    spec = pl.BlockSpec(blk, lambda b, r: (b, r, 0))

    out = pl.pallas_call(
        kernel,
        out_shape=jax.ShapeDtypeStruct((B, N, D), x.dtype),
        grid=(B, num_blocks),
        in_specs=[spec],
        out_specs=spec,
        scratch_shapes=[pltpu.VMEM((carry_rows, d_shift), x.dtype)],
        input_output_aliases=({0: 0} if use_alias else {}),
        compiler_params=pltpu.CompilerParams(
            # batch axis is independent (megacore-shardable); the token-block axis is
            # sequential because of the cross-block carry.
            dimension_semantics=("parallel", "arbitrary")),
    )(x)
    return fn(out)


def shift_video_tokens_ref(x, image_size, shift_space=True, shift_time=False):
    """Pure-JAX reference mirroring the PyTorch forward (for verification)."""
    if not shift_space and not shift_time:
        return x
    B, N, D = x.shape
    n = N - 1
    img_seq = image_size * image_size
    padding = img_seq - n % img_seq
    x_bos, xv = x[:, :1], x[:, 1:]
    xv = jnp.pad(xv, ((0, 0), (0, padding), (0, 0)))
    num_frames = (n + padding) // img_seq
    xv = xv.reshape(B, num_frames, image_size, image_size, D)

    nc = _num_chunks(shift_space, shift_time)
    dc = D // nc
    chunks = [xv[..., i * dc:(i + 1) * dc] for i in range(nc)]

    parts = []
    i = 0
    if shift_time:
        xf = chunks[i]; i += 1
        xf = jnp.concatenate([jnp.zeros_like(xf[:, :1]), xf[:, :-1]], axis=1)
        parts.append(xf)
    if shift_space:
        xh = chunks[i]; i += 1
        xh = jnp.concatenate([jnp.zeros_like(xh[:, :, :1]), xh[:, :, :-1]], axis=2)
        parts.append(xh)
        xw = chunks[i]; i += 1
        xw = jnp.concatenate([jnp.zeros_like(xw[:, :, :, :1]), xw[:, :, :, :-1]], axis=3)
        parts.append(xw)
    parts.extend(chunks[i:])
    xv = jnp.concatenate(parts, axis=-1)
    xv = xv.reshape(B, num_frames * img_seq, D)[:, :n]
    return jnp.concatenate([x_bos, xv], axis=1)


if __name__ == "__main__":
    key = jax.random.PRNGKey(0)
    B = 2
    image_size = 4          # img_seq_len = 16
    n_video_tokens = 40     # not a multiple of 16 -> exercises the ragged last frame
    N = 1 + n_video_tokens

    # D chosen per config so every chunk boundary is 128-lane aligned (lane-dense stores).
    configs = [
        (True, False, 512),   # shift_space only   (4 chunks, dc = 128)
        (True, True, 640),    # space + time       (5 chunks, dc = 128)
        (False, True, 384),   # shift_time only    (3 chunks, dc = 128)
    ]

    for i, (sspace, stime, D) in enumerate(configs):
        k = jax.random.fold_in(key, i)
        x = jax.random.normal(k, (B, N, D), dtype=jnp.float32)

        ref = jax.block_until_ready(
            shift_video_tokens_ref(x, image_size, sspace, stime))

        # Out-of-place path (x stays valid).
        out = shift_video_tokens(x, image_size, sspace, stime, in_place=False)
        out = jax.block_until_ready(out)
        assert out.shape == ref.shape
        assert jnp.allclose(out, ref, atol=1e-6, rtol=1e-6), \
            f"out-of-place mismatch for config {(sspace, stime)}"

        # Aliased in-place fast path (x may be donated -- not used afterwards).
        out2 = shift_video_tokens(x, image_size, sspace, stime, in_place=True)
        out2 = jax.block_until_ready(out2)
        assert jnp.allclose(out2, ref, atol=1e-6, rtol=1e-6), \
            f"in-place mismatch for config {(sspace, stime)}"

    print("KERNEL_OK")
</pallas_src>

<mosaic_0001>
module attributes {stable_mosaic.version = 11 : i64} {
  func.func @kernel(%arg0: i32, %arg1: i32, %arg2: memref<1x16x512xf32, #tpu.memory_space<vmem>>, %arg3: memref<1x16x512xf32, #tpu.memory_space<vmem>>, %arg4: memref<4x256xf32, #tpu.memory_space<vmem>>) attributes {dimension_semantics = [#tpu.dimension_semantics<parallel>, #tpu.dimension_semantics<arbitrary>], iteration_bounds = array<i64: 2, 3>, scalar_prefetch = 0 : i64, scratch_operands = 1 : i64, tpu.core_type = #tpu.core_type<tc>, window_params = [{transform_indices = @transform_0, window_bounds = array<i64: 1, 16, 512>}, {transform_indices = @transform_1, window_bounds = array<i64: 1, 16, 512>}]} {
    %0 = tpu.iota {dimensions = array<i32: 0>} : vector<16x1xi32>
    %c16_i32 = arith.constant 16 : i32
    %1 = arith.muli %arg1, %c16_i32 : i32
    %2 = vector.broadcast %1 : i32 to vector<16x1xi32>
    %3 = arith.addi %2, %0 : vector<16x1xi32>
    %c1_i32 = arith.constant 1 : i32
    %4 = vector.broadcast %c1_i32 : i32 to vector<16x1xi32>
    %5 = arith.subi %3, %4 : vector<16x1xi32>
    %c0 = arith.constant 0 : index
    %c0_0 = arith.constant 0 : index
    %6 = vector.load %arg4[%c0, %c0_0] : memref<4x256xf32, #tpu.memory_space<vmem>>, vector<4x128xf32>
    %c0_1 = arith.constant 0 : index
    %c0_2 = arith.constant 0 : index
    %c0_3 = arith.constant 0 : index
    %7 = vector.load %arg2[%c0_1, %c0_2, %c0_3] : memref<1x16x512xf32, #tpu.memory_space<vmem>>, vector<1x12x128xf32>
    %8 = vector.shape_cast %7 : vector<1x12x128xf32> to vector<12x128xf32>
    %9 = tpu.concatenate %6, %8 in 0 : vector<4x128xf32>, vector<12x128xf32> -> vector<16x128xf32>
    %c0_i32 = arith.constant 0 : i32
    %10 = vector.broadcast %c0_i32 : i32 to vector<16x1xi32>
    %11 = arith.cmpi sge, %5, %10 : vector<16x1xi32>
    %c16_i32_4 = arith.constant 16 : i32
    %c0_i32_5 = arith.constant 0 : i32
    %12 = arith.cmpi eq, %c16_i32_4, %c0_i32_5 : i32
    %c1_i32_6 = arith.constant 1 : i32
    %13 = arith.select %12, %c1_i32_6, %c16_i32_4 : i32
    %14 = vector.broadcast %13 : i32 to vector<16x1xi32>
    %15 = arith.remsi %5, %14 : vector<16x1xi32>
    %c0_i32_7 = arith.constant 0 : i32
    %16 = vector.broadcast %c0_i32_7 : i32 to vector<16x1xi32>
    %17 = arith.cmpi ne, %15, %16 : vector<16x1xi32>
    %c0_i32_8 = arith.constant 0 : i32
    %18 = vector.broadcast %c0_i32_8 : i32 to vector<16x1xi32>
    %19 = arith.cmpi slt, %15, %18 : vector<16x1xi32>
    %c0_i32_9 = arith.constant 0 : i32
    %20 = arith.cmpi slt, %13, %c0_i32_9 : i32
    %21 = vector.broadcast %20 : i1 to vector<16x1xi1>
    %22 = vector.broadcast %21 : vector<16x1xi1> to vector<16x1xi1>
    %23 = arith.xori %19, %22 : vector<16x1xi1>
    %24 = arith.andi %23, %17 : vector<16x1xi1>
    %25 = vector.broadcast %13 : i32 to vector<16x1xi32>
    %26 = arith.addi %15, %25 : vector<16x1xi32>
    %27 = arith.select %24, %26, %15 : vector<16x1xi1>, vector<16x1xi32>
    %c4_i32 = arith.constant 4 : i32
    %28 = vector.broadcast %c4_i32 : i32 to vector<16x1xi32>
    %29 = arith.cmpi sge, %27, %28 : vector<16x1xi32>
    %30 = arith.andi %11, %29 : vector<16x1xi1>
    %cst = arith.constant 0.000000e+00 : f32
    %31 = vector.broadcast %cst : f32 to vector<16x128xf32>
    %32 = vector.shape_cast %30 : vector<16x1xi1> to vector<16x1xi1>
    %33 = vector.broadcast %32 : vector<16x1xi1> to vector<16x128xi1>
    %34 = arith.select %33, %9, %31 : vector<16x128xi1>, vector<16x128xf32>
    %c0_10 = arith.constant 0 : index
    %c0_11 = arith.constant 0 : index
    %c0_12 = arith.constant 0 : index
    %35 = vector.load %arg3[%c0_10, %c0_11, %c0_12] : memref<1x16x512xf32, #tpu.memory_space<vmem>>, vector<1x16x128xf32>
    %36 = vector.shape_cast %35 : vector<1x16x128xf32> to vector<16x128xf32>
    %37 = vector.shape_cast %34 : vector<16x128xf32> to vector<1x16x128xf32>
    tpu.vector_store %arg3[%c0_10, %c0_11, %c0_12], %37 {strides = array<i32>} : memref<1x16x512xf32, #tpu.memory_space<vmem>>, vector<1x16x128xf32>,
    %c3 = arith.constant 3 : index
    %c128 = arith.constant 128 : index
    %38 = vector.load %arg4[%c3, %c128] : memref<4x256xf32, #tpu.memory_space<vmem>>, vector<1x128xf32>
    %c0_13 = arith.constant 0 : index
    %c0_14 = arith.constant 0 : index
    %c128_15 = arith.constant 128 : index
    %39 = vector.load %arg2[%c0_13, %c0_14, %c128_15] : memref<1x16x512xf32, #tpu.memory_space<vmem>>, vector<1x15x128xf32>
    %40 = vector.shape_cast %39 : vector<1x15x128xf32> to vector<15x128xf32>
    %41 = tpu.concatenate %38, %40 in 0 : vector<1x128xf32>, vector<15x128xf32> -> vector<16x128xf32>
    %c0_i32_16 = arith.constant 0 : i32
    %42 = vector.broadcast %c0_i32_16 : i32 to vector<16x1xi32>
    %43 = arith.cmpi sge, %5, %42 : vector<16x1xi32>
    %c4_i32_17 = arith.constant 4 : i32
    %c0_i32_18 = arith.constant 0 : i32
    %44 = arith.cmpi eq, %c4_i32_17, %c0_i32_18 : i32
    %c1_i32_19 = arith.constant 1 : i32
    %45 = arith.select %44, %c1_i32_19, %c4_i32_17 : i32
    %46 = vector.broadcast %45 : i32 to vector<16x1xi32>
    %47 = arith.remsi %5, %46 : vector<16x1xi32>
    %c0_i32_20 = arith.constant 0 : i32
    %48 = vector.broadcast %c0_i32_20 : i32 to vector<16x1xi32>
    %49 = arith.cmpi ne, %47, %48 : vector<16x1xi32>
    %c0_i32_21 = arith.constant 0 : i32
    %50 = vector.broadcast %c0_i32_21 : i32 to vector<16x1xi32>
    %51 = arith.cmpi slt, %47, %50 : vector<16x1xi32>
    %c0_i32_22 = arith.constant 0 : i32
    %52 = arith.cmpi slt, %45, %c0_i32_22 : i32
    %53 = vector.broadcast %52 : i1 to vector<16x1xi1>
    %54 = vector.broadcast %53 : vector<16x1xi1> to vector<16x1xi1>
    %55 = arith.xori %51, %54 : vector<16x1xi1>
    %56 = arith.andi %55, %49 : vector<16x1xi1>
    %57 = vector.broadcast %45 : i32 to vector<16x1xi32>
    %58 = arith.addi %47, %57 : vector<16x1xi32>
    %59 = arith.select %56, %58, %47 : vector<16x1xi1>, vector<16x1xi32>
    %c1_i32_23 = arith.constant 1 : i32
    %60 = vector.broadcast %c1_i32_23 : i32 to vector<16x1xi32>
    %61 = arith.cmpi sge, %59, %60 : vector<16x1xi32>
    %62 = arith.andi %43, %61 : vector<16x1xi1>
    %cst_24 = arith.constant 0.000000e+00 : f32
    %63 = vector.broadcast %cst_24 : f32 to vector<16x128xf32>
    %64 = vector.shape_cast %62 : vector<16x1xi1> to vector<16x1xi1>
    %65 = vector.broadcast %64 : vector<16x1xi1> to vector<16x128xi1>
    %66 = arith.select %65, %41, %63 : vector<16x128xi1>, vector<16x128xf32>
    %c0_25 = arith.constant 0 : index
    %c0_26 = arith.constant 0 : index
    %c128_27 = arith.constant 128 : index
    %67 = vector.load %arg3[%c0_25, %c0_26, %c128_27] : memref<1x16x512xf32, #tpu.memory_space<vmem>>, vector<1x16x128xf32>
    %68 = vector.shape_cast %67 : vector<1x16x128xf32> to vector<16x128xf32>
    %69 = vector.shape_cast %66 : vector<16x128xf32> to vector<1x16x128xf32>
    tpu.vector_store %arg3[%c0_25, %c0_26, %c128_27], %69 {strides = array<i32>} : memref<1x16x512xf32, #tpu.memory_space<vmem>>, vector<1x16x128xf32>,
    %c0_28 = arith.constant 0 : index
    %c0_29 = arith.constant 0 : index
    %c256 = arith.constant 256 : index
    %70 = vector.load %arg2[%c0_28, %c0_29, %c256] : memref<1x16x512xf32, #tpu.memory_space<vmem>>, vector<1x16x256xf32>
    %71 = vector.shape_cast %70 : vector<1x16x256xf32> to vector<16x256xf32>
    %c0_30 = arith.constant 0 : index
    %c0_31 = arith.constant 0 : index
    %c256_32 = arith.constant 256 : index
    %72 = vector.load %arg3[%c0_30, %c0_31, %c256_32] : memref<1x16x512xf32, #tpu.memory_space<vmem>>, vector<1x16x256xf32>
    %73 = vector.shape_cast %72 : vector<1x16x256xf32> to vector<16x256xf32>
    %74 = vector.shape_cast %71 : vector<16x256xf32> to vector<1x16x256xf32>
    tpu.vector_store %arg3[%c0_30, %c0_31, %c256_32], %74 {strides = array<i32>} : memref<1x16x512xf32, #tpu.memory_space<vmem>>, vector<1x16x256xf32>,
    %c0_i32_33 = arith.constant 0 : i32
    %75 = arith.cmpi eq, %arg1, %c0_i32_33 : i32
    %76 = arith.extui %75 : i1 to i32
    %c0_i32_34 = arith.constant 0 : i32
    %77 = arith.cmpi ne, %76, %c0_i32_34 : i32
    scf.if %77 {
      %c0_39 = arith.constant 0 : index
      %c0_40 = arith.constant 0 : index
      %c0_41 = arith.constant 0 : index
      %81 = vector.load %arg2[%c0_39, %c0_40, %c0_41] : memref<1x16x512xf32, #tpu.memory_space<vmem>>, vector<1x1x512xf32>
      %82 = vector.shape_cast %81 : vector<1x1x512xf32> to vector<1x512xf32>
      %c0_42 = arith.constant 0 : index
      %c0_43 = arith.constant 0 : index
      %c0_44 = arith.constant 0 : index
      %83 = vector.load %arg3[%c0_42, %c0_43, %c0_44] : memref<1x16x512xf32, #tpu.memory_space<vmem>>, vector<1x1x512xf32>
      %84 = vector.shape_cast %83 : vector<1x1x512xf32> to vector<1x512xf32>
      %85 = vector.shape_cast %82 : vector<1x512xf32> to vector<1x1x512xf32>
      tpu.vector_store %arg3[%c0_42, %c0_43, %c0_44], %85 {strides = array<i32>} : memref<1x16x512xf32, #tpu.memory_space<vmem>>, vector<1x1x512xf32>,
    } else {
    }
    %c0_35 = arith.constant 0 : index
    %c12 = arith.constant 12 : index
    %c0_36 = arith.constant 0 : index
    %78 = vector.load %arg2[%c0_35, %c12, %c0_36] : memref<1x16x512xf32, #tpu.memory_space<vmem>>, vector<1x4x256xf32>
    %79 = vector.shape_cast %78 : vector<1x4x256xf32> to vector<4x256xf32>
    %c0_37 = arith.constant 0 : index
    %c0_38 = arith.constant 0 : index
    %80 = vector.load %arg4[%c0_37, %c0_38] : memref<4x256xf32, #tpu.memory_space<vmem>>, vector<4x256xf32>
    tpu.vector_store %arg4[%c0_37, %c0_38], %79 {strides = array<i32>} : memref<4x256xf32, #tpu.memory_space<vmem>>, vector<4x256xf32>,
    return
  }
  func.func @transform_0(%arg0: i32, %arg1: i32) -> (i32, i32, i32) {
    %c0_i32 = arith.constant 0 : i32
    %c0_i32_0 = arith.constant 0 : i32
    return %arg0, %arg1, %c0_i32 : i32, i32, i32
  }
  func.func @transform_1(%arg0: i32, %arg1: i32) -> (i32, i32, i32) {
    %c0_i32 = arith.constant 0 : i32
    %c0_i32_0 = arith.constant 0 : i32
    return %arg0, %arg1, %c0_i32 : i32, i32, i32
  }
}

</mosaic_0001>

<llo_original>
// kernel: tpu_custom_call.1
$region0: #{tpu_custom_call.1}
  #allocation0 [shape = 'u32[]', space=smem, size = 0x4, offset = 0x4, fixed_abs, tag = 'smem constant byte address 0x4 - core index']
  #allocation1 [shape = 'u32[144,128]{1,0:T(1,128)}', space=vmem, size = 0x12000, scoped, tag = 'internal scratch']
  #allocation2 [shape = 'f32[4,256]{1,0:T(4,128)}', space=vmem, size = 0x1000, scoped, tag = 'scratch operand']
  %s0 = inlined_call_operand.vmem [shape: f32[2,41,512], index: 0, kind: input, shape index: {}]
  %s1 = inlined_call_operand.vmem [shape: f32[2,41,512], index: 1, kind: output, shape index: {}]
  %s2 = sld [smem:[#allocation0]]
  $region41: #{tpu_custom_call.1} parent=0
    _
  %s4 = ssub.s32 1, %s2
  %s5 = scalar_select 0, %s4, %s2
  loop: start=0, step=1, limit=8
  $region2: #{tpu_custom_call.1} parent=0 // loop_pre_header
    _
  $region3: #{tpu_custom_call.1} parent=0 // loop_header
    %s7 = sphi 0, %s11
    %p8 = scmp.ge.s32.totalorder %s7, 8
    %s14 = sphi 0, %s26
    %s15 = sphi 0, %s22
    %s16 = sphi 0, %s14
    %s17 = sphi 0, %s15
    %s18 = sphi 0, %s16
    %s19 = sphi 0, %s17
    %s31 = sphi 0, %s33
    %s34 = sphi 0, %s31
    %s35 = sphi 0, %s34
    %s51 = sphi 0, %s35
    %s59 = sphi 0, %s61
    %s62 = sphi 0, %s59
    %s63 = sphi 0, %s62
    %s79 = sphi 0, %s63
  $region4: #{tpu_custom_call.1} parent=0 // loop_header_branch
    %10 = sbr.rel (%p8) target = $region8
  $region5: #{tpu_custom_call.1} parent=0 // loop_body
    %s12 = ssub.s32 %s7, 1
    %s13 = ssub.s32 %s7, 2
    %s20 = sadd.s32 1, %s15
    %p21 = scmp.ge.s32.totalorder %s20, 3
    %s22 = scalar_select %p21, 0, %s20
    %s23 = sadd.s32 1, %s14
    %s24 = scalar_select %p21, %s23, %s14
    %p25 = scmp.ge.s32.totalorder %s24, 2
    %s26 = scalar_select %p25, 0, %s24
    %s27 = ssub.s32 %s14, %s26
    %s28 = ssub.s32 %s15, %s22
    %s29 = sor.u32 %s27, %s28
    %p30 = scmp.eq.s32.totalorder %s29, 0
    %s32 = sadd.s32 %s31, 1
    %s33 = scalar_select %p30, %s31, %s32
    %p36 = pneg %p30
    %p37 = scmp.eq.s32.totalorder %s7, 5
    %p38 = por %p36, %p37
    %p39 = scmp.ne.s32.totalorder %s31, %s34
    %p40 = scmp.eq.s32.totalorder %s7, 0
    %p41 = por %p39, %p40
    %p42 = scmp.ne.s32.totalorder %s31, %s34
    %p43 = scmp.eq.s32.totalorder %s12, 5
    %p44 = por %p42, %p43
    %p45 = scmp.ne.s32.totalorder %s34, %s35
    %p46 = scmp.eq.s32.totalorder %s12, 0
    %p47 = por %p45, %p46
    %p48 = scmp.ne.s32.totalorder %s34, %s35
    %p49 = scmp.eq.s32.totalorder %s13, 5
    %p50 = por %p48, %p49
    %p52 = scmp.ne.s32.totalorder %s35, %s51
    %p53 = scmp.eq.s32.totalorder %s13, 0
    %p54 = por %p52, %p53
    %s55 = ssub.s32 %s14, %s26
    %s56 = ssub.s32 %s15, %s22
    %s57 = sor.u32 %s55, %s56
    %p58 = scmp.eq.s32.totalorder %s57, 0
    %s60 = sadd.s32 %s59, 1
    %s61 = scalar_select %p58, %s59, %s60
    %p64 = pneg %p58
    %p65 = scmp.eq.s32.totalorder %s7, 5
    %p66 = por %p64, %p65
    %p67 = scmp.ne.s32.totalorder %s59, %s62
    %p68 = scmp.eq.s32.totalorder %s7, 0
    %p69 = por %p67, %p68
    %p70 = scmp.ne.s32.totalorder %s59, %s62
    %p71 = scmp.eq.s32.totalorder %s12, 5
    %p72 = por %p70, %p71
    %p73 = scmp.ne.s32.totalorder %s62, %s63
    %p74 = scmp.eq.s32.totalorder %s12, 0
    %p75 = por %p73, %p74
    %p76 = scmp.ne.s32.totalorder %s62, %s63
    %p77 = scmp.eq.s32.totalorder %s13, 5
    %p78 = por %p76, %p77
    %p80 = scmp.ne.s32.totalorder %s63, %s79
    %p81 = scmp.eq.s32.totalorder %s13, 0
    %p82 = por %p80, %p81
    %p83 = scmp.le.s32.totalorder 1, %s7
    %p84 = scmp.lt.s32.totalorder %s7, 7
    %p85 = pnand %p83, %p84
    %p86 = pneg %p85
    // Predicated region
    $region9: #{tpu_custom_call.1} parent=5 // pred_check
      _
    $region10: #{tpu_custom_call.1} parent=5 // pred_check_branch
      %88 = sbr.rel (%p85) target = $region12
    $region11: #{tpu_custom_call.1} parent=5 // pred_region
      %s89 = ssub.s32 %s7, 1
    $region12: #{tpu_custom_call.1} parent=5 // pred_fallthru
      _
    %p90 = scmp.lt.s32.totalorder %s7, 6
    // Predicated region
    $region13: #{tpu_custom_call.1} parent=5 // pred_check
      %p91 = pneg %p90
    $region14: #{tpu_custom_call.1} parent=5 // pred_check_branch
      %93 = sbr.rel (%p91) target = $region16
    $region15: #{tpu_custom_call.1} parent=5 // pred_region
      // Predicated region
      $region17: #{tpu_custom_call.1} parent=15 // pred_check
        %p94 = pneg %p41
      $region18: #{tpu_custom_call.1} parent=15 // pred_check_branch
        %96 = sbr.rel (%p94) target = $region20
      $region19: #{tpu_custom_call.1} parent=15 // pred_region
        %s97 = smul.u32 2, %s15
        %p98 = scmp.lt.s32.totalorder %s14, 1
        %s99 = scalar_select %p98, %s14, 1
        %p100 = scmp.lt.s32.totalorder %s97, 5
        %s101 = scalar_select %p100, %s97, 5
        %s102 = smul.addr %s101, 4
        %s103 = smul.addr %s99, 24
        %s104 = sadd.s32 %s102, %s103
        %s105 = smul.addr %s104, 8
        %s106 = scalar_lea.vmem %s0, %s105
        %s107 = smul.u32 2, %s15
      $region20: #{tpu_custom_call.1} parent=15 // pred_fallthru
        _
    $region16: #{tpu_custom_call.1} parent=5 // pred_fallthru
      _
    %p108 = scmp.le.s32.totalorder 1, %s7
    %p109 = scmp.lt.s32.totalorder %s7, 7
    %p110 = pnand %p108, %p109
    %p111 = pneg %p110
    // Predicated region
    $region21: #{tpu_custom_call.1} parent=5 // pred_check
      _
    $region22: #{tpu_custom_call.1} parent=5 // pred_check_branch
      %113 = sbr.rel (%p110) target = $region24
    $region23: #{tpu_custom_call.1} parent=5 // pred_region
      %s114 = ssub.s32 %s7, 1
      %s115 = smul.u32 2, %s17
      %p116 = scmp.lt.s32.totalorder %s16, 1
      %s117 = scalar_select %p116, %s16, 1
      %p118 = scmp.lt.s32.totalorder %s115, 5
      %s119 = scalar_select %p118, %s115, 5
      %s120 = smul.addr %s119, 4
      %s121 = smul.addr %s117, 24
      %s122 = sadd.s32 %s120, %s121
      %s123 = smul.addr %s122, 8
      %s124 = scalar_lea.vmem %s0, %s123
      %p125 = pneg %p47
      %p126 = pneg %p44
      %p127 = pneg %p75
      %p128 = pneg %p72
      %s129 = smul.u32 2, %s17
      %p130 = scmp.lt.s32.totalorder %s16, 1
      %s131 = scalar_select %p130, %s16, 1
      %p132 = scmp.lt.s32.totalorder %s129, 5
      %s133 = scalar_select %p132, %s129, 5
      %s134 = smul.addr %s133, 4
      %s135 = smul.addr %s131, 24
      %s136 = sadd.s32 %s134, %s135
      %s137 = smul.addr %s136, 8
      %s138 = scalar_lea.vmem %s1, %s137
      %s139 = smul.u32 2, %s17
      %p140 = scmp.lt.s32.totalorder %s16, 1
      %s141 = scalar_select %p140, %s16, 1
      %p142 = scmp.lt.s32.totalorder %s139, 5
      %s143 = scalar_select %p142, %s139, 5
      %s144 = smul.addr %s143, 4
      %s145 = smul.addr %s141, 24
      %s146 = sadd.s32 %s144, %s145
      %s147 = smul.addr %s146, 8
      %s148 = scalar_lea.vmem %s0, %s147
      %s149 = smul.u32 2, %s17
      %s150 = smul.u32 2, %s17
      %p151 = scmp.lt.s32.totalorder %s16, 1
      %s152 = scalar_select %p151, %s16, 1
      %p153 = scmp.lt.s32.totalorder %s150, 5
      %s154 = scalar_select %p153, %s150, 5
      %s155 = smul.addr %s154, 4
      %s156 = smul.addr %s152, 24
      %s157 = sadd.s32 %s155, %s156
      %s158 = smul.addr %s157, 8
      %s159 = scalar_lea.vmem %s1, %s158
      %s160 = smul.u32 2, %s17
      %v161 = vlaneseq
      %v162 = vshrl.u32 %v161, 7
      %v163 = vadd.s32 %v162, 8
      %s164 = smul.u32 %s17, 16
      %v165 = vstv %s164
      %v166 = vadd.s32 %v165, %v162
      %v167 = vadd.s32 %v165, %v163
      %v168 = vsub.s32 %v166, 1
      %v169 = vsub.s32 %v167, 1
      %v170 = vld [vmem:[#allocation2] sm:$0xf]
      %v171 = vld [vmem:[%s148] sm:$0xff]
      %v172 = vld [vmem:[%s148 + $0x20] sm:$0xf]
      %vm175 = vcmask 1043456
      %v176 = vrot.slane %v171, 4
      %v177 = vrot.slane %v172, 4
      %v178 = vsel %vm175, %v176, %v177
      %v181 = vsel %vm175, %v170, %v176
      %vm182 = vcmp.ge.s32.totalorder %v168, 0
      %vm183 = vcmp.ge.s32.totalorder %v169, 0
      %vm184 = vcmp.lt.s32.totalorder %v168, 0
      %v185 = vsub.s32 0, %v168
      %v186 = vsel %vm184, %v185, %v168
      %v187 = vshrl.u32 %v186, 4
      %v188 = vand.u32 %v186, 15
      %v189 = vsub.s32 0, %v188
      %v190 = vsel %vm184, %v189, %v188
      %vm191 = vcmp.lt.s32.totalorder %v169, 0
      %v192 = vsub.s32 0, %v169
      %v193 = vsel %vm191, %v192, %v169
      %v194 = vshrl.u32 %v193, 4
      %v195 = vand.u32 %v193, 15
      %v196 = vsub.s32 0, %v195
      %v197 = vsel %vm191, %v196, %v195
      %vm198 = vcmp.ne.s32.totalorder %v190, 0
      %vm199 = vcmp.ne.s32.totalorder %v197, 0
      %vm200 = vcmp.lt.s32.totalorder %v190, 0
      %vm201 = vcmp.lt.s32.totalorder %v197, 0
      %vm202 = vmand %vm200, %vm198
      %vm203 = vmand %vm201, %vm199
      %v204 = vadd.s32 %v190, 16
      %v205 = vadd.s32 %v197, 16
      %v206 = vsel %vm202, %v204, %v190
      %v207 = vsel %vm203, %v205, %v197
      %vm208 = vcmp.ge.s32.totalorder %v206, 4
      %vm209 = vcmp.ge.s32.totalorder %v207, 4
      %vm210 = vmand %vm182, %vm208
      %vm211 = vmand %vm183, %vm209
      %v212 = vsel %vm210, 1, 0
      %v213 = vsel %vm211, 1, 0
      %vm214 = vcmp.eq.s32.totalorder %v212, 1
      %vm215 = vcmp.eq.s32.totalorder %v213, 1
      %v216 = vsel %vm214, %v181, 0.0
      %v217 = vsel %vm215, %v178, 0.0
      %218 = vst [vmem:[%s159] sm:$0xff] %v216
      %219 = vst [vmem:[%s159 + $0x20] sm:$0xff] %v217
      %v220 = vld [vmem:[#allocation2 + $0x7] sm:$0x1]
      %v221 = vld [vmem:[%s148 + $0x8] sm:$0xff]
      %v222 = vld [vmem:[%s148 + $0x28] sm:$0x7f]
      %vm225 = vcmask 1040384
      %v226 = vrot.slane %v221, 7
      %v227 = vrot.slane %v222, 7
      %v228 = vsel %vm225, %v226, %v227
      %v231 = vsel %vm225, %v220, %v226
      %vm232 = vcmp.lt.s32.totalorder %v168, 0
      %v233 = vsub.s32 0, %v168
      %v234 = vsel %vm232, %v233, %v168
      %v235 = vshrl.u32 %v234, 2
      %v236 = vand.u32 %v234, 3
      %v237 = vsub.s32 0, %v236
      %v238 = vsel %vm232, %v237, %v236
      %vm239 = vcmp.lt.s32.totalorder %v169, 0
      %v240 = vsub.s32 0, %v169
      %v241 = vsel %vm239, %v240, %v169
      %v242 = vshrl.u32 %v241, 2
      %v243 = vand.u32 %v241, 3
      %v244 = vsub.s32 0, %v243
      %v245 = vsel %vm239, %v244, %v243
      %vm246 = vcmp.ne.s32.totalorder %v238, 0
      %vm247 = vcmp.ne.s32.totalorder %v245, 0
      %vm248 = vcmp.lt.s32.totalorder %v238, 0
      %vm249 = vcmp.lt.s32.totalorder %v245, 0
      %vm250 = vmand %vm248, %vm246
      %vm251 = vmand %vm249, %vm247
      %v252 = vadd.s32 %v238, 4
      %v253 = vadd.s32 %v245, 4
      %v254 = vsel %vm250, %v252, %v238
      %v255 = vsel %vm251, %v253, %v245
      %vm256 = vcmp.ge.s32.totalorder %v254, 1
      %vm257 = vcmp.ge.s32.totalorder %v255, 1
      %vm258 = vmand %vm182, %vm256
      %vm259 = vmand %vm183, %vm257
      %v260 = vsel %vm258, 1, 0
      %v261 = vsel %vm259, 1, 0
      %vm262 = vcmp.eq.s32.totalorder %v260, 1
      %vm263 = vcmp.eq.s32.totalorder %v261, 1
      %v264 = vsel %vm262, %v231, 0.0
      %v265 = vsel %vm263, %v228, 0.0
      %266 = vst [vmem:[%s159 + $0x8] sm:$0xff] %v264
      %267 = vst [vmem:[%s159 + $0x28] sm:$0xff] %v265
      %v268 = vld [vmem:[%s148 + $0x10] sm:$0xff]
      %v269 = vld [vmem:[%s148 + $0x18] sm:$0xff]
      %v270 = vld [vmem:[%s148 + $0x30] sm:$0xff]
      %v271 = vld [vmem:[%s148 + $0x38] sm:$0xff]
      %272 = vst [vmem:[%s159 + $0x10] sm:$0xff] %v268
      %273 = vst [vmem:[%s159 + $0x18] sm:$0xff] %v269
      %274 = vst [vmem:[%s159 + $0x30] sm:$0xff] %v270
      %275 = vst [vmem:[%s159 + $0x38] sm:$0xff] %v271
      %p276 = scmp.eq.s32.totalorder %s17, 0
      // Predicated region
      $region25: #{tpu_custom_call.1} parent=23 // pred_check
        %p277 = pneg %p276
      $region26: #{tpu_custom_call.1} parent=23 // pred_check_branch
        %279 = sbr.rel (%p277) target = $region28
      $region27: #{tpu_custom_call.1} parent=23 // pred_region
        %v280 = vld [vmem:[%s148] ss:$8 sm:$0xf]
        %v281 = vlaneseq
        %vm282 = vcmp.ge.s32.totalorder %v281, 0
        %vm283 = vcmp.lt.s32.totalorder %v281, 512
        %vm284 = vmand %vm282, %vm283
        %285 = vst.msk [vmem:[%s159] ss:$8 sm:$0xf] %vm284, %v280
        %286 = vst.msk [vmem:[%s159] ss:$8 sm:$0x0] %vm284, %v280
      $region28: #{tpu_custom_call.1} parent=23 // pred_fallthru
        _
      %v287 = vld [vmem:[%s148 + $0x20] sm:$0xf0]
      %v288 = vld [vmem:[%s148 + $0x28] sm:$0xf0]
      %v291 = vcombine.high %v287, %v288
      %293 = vst [vmem:[#allocation2] sm:$0xff] %v291
      %s294 = smul.u32 2, %s17
      %p295 = scmp.lt.s32.totalorder %s16, 1
      %s296 = scalar_select %p295, %s16, 1
      %p297 = scmp.lt.s32.totalorder %s294, 5
      %s298 = scalar_select %p297, %s294, 5
      %s299 = smul.addr %s298, 4
      %s300 = smul.addr %s296, 24
      %s301 = sadd.s32 %s299, %s300
      %s302 = smul.addr %s301, 8
      %s303 = scalar_lea.vmem %s1, %s302
      // Predicated region
      $region29: #{tpu_custom_call.1} parent=23 // pred_check
        %p304 = pneg %p72
      $region30: #{tpu_custom_call.1} parent=23 // pred_check_branch
        %306 = sbr.rel (%p304) target = $region32
      $region31: #{tpu_custom_call.1} parent=23 // pred_region
        %s307 = smul.u32 2, %s17
      $region32: #{tpu_custom_call.1} parent=23 // pred_fallthru
        _
    $region24: #{tpu_custom_call.1} parent=5 // pred_fallthru
      _
    %p308 = scmp.le.s32.totalorder 2, %s7
    // Predicated region
    $region33: #{tpu_custom_call.1} parent=5 // pred_check
      %p309 = pneg %p308
    $region34: #{tpu_custom_call.1} parent=5 // pred_check_branch
      %311 = sbr.rel (%p309) target = $region36
    $region35: #{tpu_custom_call.1} parent=5 // pred_region
      %s312 = ssub.s32 %s7, 2
      // Predicated region
      $region37: #{tpu_custom_call.1} parent=35 // pred_check
        %p313 = pneg %p78
      $region38: #{tpu_custom_call.1} parent=35 // pred_check_branch
        %315 = sbr.rel (%p313) target = $region40
      $region39: #{tpu_custom_call.1} parent=35 // pred_region
        %s316 = smul.u32 2, %s19
        %p317 = scmp.lt.s32.totalorder %s18, 1
        %s318 = scalar_select %p317, %s18, 1
        %p319 = scmp.lt.s32.totalorder %s316, 5
        %s320 = scalar_select %p319, %s316, 5
        %s321 = smul.addr %s320, 4
        %s322 = smul.addr %s318, 24
        %s323 = sadd.s32 %s321, %s322
        %s324 = smul.addr %s323, 8
        %s325 = scalar_lea.vmem %s1, %s324
      $region40: #{tpu_custom_call.1} parent=35 // pred_fallthru
        _
    $region36: #{tpu_custom_call.1} parent=5 // pred_fallthru
      _
  $region6: #{tpu_custom_call.1} parent=0 // loop_footer
    %s11 = sadd.s32 1, %s7
  $region7: #{tpu_custom_call.1} parent=0 // loop_footer_branch
    %6 = sbr.rel target = $region3
  $region8: #{tpu_custom_call.1} parent=0 // loop_exit
    _

</llo_original>
